<compile_context>
chip_gen: v7x
topology: tpu7x:2x2x1
jax: 0.10.0
libtpu: 0.0.40
codegen_flags: <defaults>
</compile_context>

<pallas_src>
import functools

import jax
import jax.numpy as jnp
from jax.experimental import pallas as pl
from jax.experimental.pallas import tpu as pltpu

_EPS = 1e-6


# ---------------------------------------------------------------------------
# Fused single-pass kernel: whole (C*H, W) plane(s) per grid step.
# ---------------------------------------------------------------------------
def _grn_fused_kernel(x_ref, gamma_ref, beta_ref, o_ref):
    # x_ref:               (b_tile, C*H, W)  -- NCHW plane via free reshape
    # gamma_ref, beta_ref: (1, C*H, 1)       -- per-channel, repeated over H
    # TODO(synk): for bf16 inputs, chunk the C*H reduce with an f32 accumulator
    # instead of materializing a full-block f32 upcast.
    x = x_ref[...].astype(jnp.float32)                      # no-op for f32 in
    # Gx[b, w] = ||x[b, :, w]||_2  — sublane-axis reduce over C*H.
    gx = jnp.sqrt(jnp.sum(x * x, axis=1, keepdims=True))    # (b, 1, W)
    # Nx = Gx / (mean_W(Gx) + eps)  — exact division (matches the reference).
    nx = gx / (jnp.mean(gx, axis=-1, keepdims=True) + _EPS)  # (b, 1, W)
    gamma = gamma_ref[...].astype(jnp.float32)               # (1, CH, 1)
    beta = beta_ref[...].astype(jnp.float32)
    o_ref[...] = (gamma * (x * nx) + beta + x).astype(o_ref.dtype)


# ---------------------------------------------------------------------------
# Two-pass fallback for planes too large to hold as one fused VMEM block.
# Pass 1: accumulate sum-of-squares per (n, w) over channel tiles.
# Pass 2: elementwise scale / affine / residual.
# ---------------------------------------------------------------------------
def _grn_sumsq_kernel(x_ref, ss_ref):
    # x_ref:  (c_tile, H, W) rows of the (N*C, H, W) view for one batch elem
    # ss_ref: (1, 1, W) f32 accumulator, resident across the channel grid axis
    @pl.when(pl.program_id(1) == 0)
    def _():
        ss_ref[...] = jnp.zeros_like(ss_ref)

    x = x_ref[...].astype(jnp.float32)
    s = jnp.sum(x * x, axis=1)                 # (c_tile, W) — sublane (H) reduce
    s = jnp.sum(s, axis=0, keepdims=True)      # (1, W)      — sublane (C) reduce
    ss_ref[...] += s[None]                     # (1, 1, W)


def _grn_scale_kernel(x_ref, nx_ref, gamma_ref, beta_ref, o_ref):
    # x_ref: (c_tile, H, W); nx_ref: (1, 1, W); gamma/beta: (c_tile, 1, 1)
    x = x_ref[...].astype(jnp.float32)
    nx = nx_ref[...].astype(jnp.float32)
    gamma = gamma_ref[...].astype(jnp.float32)
    beta = beta_ref[...].astype(jnp.float32)
    o_ref[...] = (gamma * (x * nx) + beta + x).astype(o_ref.dtype)


# ---------------------------------------------------------------------------
# Host-side planning helpers.
# ---------------------------------------------------------------------------
def _vmem_capacity_bytes():
    try:
        return int(pltpu.get_tpu_info().vmem_capacity_bytes)
    except Exception:
        return 64 * 1024 * 1024  # conservative (v7x per-core VMEM)


def _pick_batch_tile(n, plane_bytes, target_bytes):
    # Largest batch tile whose block stays <= target_bytes (always >= 1 plane),
    # capped so the grid has >= 2 steps when N >= 2 (keeps both v7x TCs busy).
    tile = max(1, min(n, target_bytes // max(plane_bytes, 1)))
    if n >= 2:
        tile = min(tile, -(-n // 2))  # ceil(n / 2) -> at least 2 grid steps
    return tile


def _largest_divisor_within(n, limit):
    best = 1
    for d in range(1, n + 1):
        if n % d == 0 and d <= limit:
            best = d
    return best


@functools.partial(jax.jit, static_argnames=("fused_plane_limit_bytes",))
def grn_pallas(x, gamma, beta, *, fused_plane_limit_bytes=None):
    """GRN forward. x: (N, C, H, W); gamma/beta: any shape holding C values."""
    N, C, H, W = x.shape
    CH = C * H
    gamma = jnp.asarray(gamma, jnp.float32).reshape(C)
    beta = jnp.asarray(beta, jnp.float32).reshape(C)

    elem_bytes = jnp.dtype(x.dtype).itemsize
    plane_bytes = CH * W * elem_bytes
    plane_f32_bytes = CH * W * 4

    # Generation-aware budgets: v5e/v6e have 128 MiB VMEM, v7x only 64 MiB.
    big_vmem = _vmem_capacity_bytes() >= (96 << 20)
    vmem_budget = (64 << 20) if big_vmem else (48 << 20)
    target_bytes = (8 << 20) if big_vmem else (4 << 20)
    if fused_plane_limit_bytes is None:
        fused_plane_limit_bytes = vmem_budget // 8

    if plane_bytes <= fused_plane_limit_bytes:
        # ------------------- fused single-pass path -------------------
        b_tile = _pick_batch_tile(N, plane_bytes, target_bytes)
        steps = pl.cdiv(N, b_tile)                 # ragged last block is fine:
        x3 = x.reshape(N, CH, W)                   # rows are independent.
        g3 = jnp.repeat(gamma, H).reshape(1, CH, 1)
        b3 = jnp.repeat(beta, H).reshape(1, CH, 1)

        # Real working set: double-buffered in+out blocks, f32 temporaries,
        # lane-padded gamma/beta, plus slack — capped below physical VMEM.
        block_bytes = b_tile * plane_bytes
        block_f32 = b_tile * plane_f32_bytes
        gb_pad = 2 * 2 * (-(-CH // 8) * 8) * 128 * 4
        est = 4 * block_bytes + 3 * block_f32 + gb_pad + (2 << 20)
        vmem_limit = int(min(vmem_budget, max(est, 16 << 20)))

        # NOTE: the output lane dim is W (full-extent), which may be < 128 for
        # small feature maps; making it 128-dense would require an in-kernel
        # relayout that is not worth it for this HBM-bound op.
        out3 = pl.pallas_call(
            _grn_fused_kernel,
            out_shape=jax.ShapeDtypeStruct((N, CH, W), x.dtype),
            grid=(steps,),
            in_specs=[
                pl.BlockSpec((b_tile, CH, W), lambda n: (n, 0, 0)),
                pl.BlockSpec((1, CH, 1), lambda n: (0, 0, 0)),
                pl.BlockSpec((1, CH, 1), lambda n: (0, 0, 0)),
            ],
            out_specs=pl.BlockSpec((b_tile, CH, W), lambda n: (n, 0, 0)),
            compiler_params=pltpu.CompilerParams(
                dimension_semantics=("parallel",),
                vmem_limit_bytes=vmem_limit,
            ),
        )(x3, g3, b3)
        return out3.reshape(N, C, H, W)

    # ---------------------- two-pass fallback path ----------------------
    # A single (C*H, W) plane no longer fits comfortably in VMEM: tile the
    # channel axis. x is read twice from HBM (unavoidable) and written once.
    hw_bytes = H * W * elem_bytes
    c_tile = _largest_divisor_within(C, max(1, target_bytes // max(hw_bytes, 1)))
    # TODO(synk): if even a single (1, H, W) slice exceeds the VMEM budget
    # (extremely large H*W), add an H-tiling grid axis as well.
    c_steps = C // c_tile
    x_rows = x.reshape(N * C, H, W)                # free row-major reshape

    vmem_limit = int(min(vmem_budget,
                         max(6 * c_tile * H * W * 4 + (4 << 20), 16 << 20)))

    ss = pl.pallas_call(
        _grn_sumsq_kernel,
        out_shape=jax.ShapeDtypeStruct((N, 1, W), jnp.float32),
        grid=(N, c_steps),
        in_specs=[
            pl.BlockSpec((c_tile, H, W), lambda n, c: (n * c_steps + c, 0, 0)),
        ],
        out_specs=pl.BlockSpec((1, 1, W), lambda n, c: (n, 0, 0)),
        compiler_params=pltpu.CompilerParams(
            dimension_semantics=("parallel", "arbitrary"),
            vmem_limit_bytes=vmem_limit,
        ),
    )(x_rows)

    gx = jnp.sqrt(ss)                                             # (N, 1, W)
    nx = gx / (jnp.mean(gx, axis=-1, keepdims=True) + _EPS)       # tiny XLA op

    g3 = gamma.reshape(C, 1, 1)
    b3 = beta.reshape(C, 1, 1)
    out_rows = pl.pallas_call(
        _grn_scale_kernel,
        out_shape=jax.ShapeDtypeStruct((N * C, H, W), x.dtype),
        grid=(N, c_steps),
        in_specs=[
            pl.BlockSpec((c_tile, H, W), lambda n, c: (n * c_steps + c, 0, 0)),
            pl.BlockSpec((1, 1, W), lambda n, c: (n, 0, 0)),
            pl.BlockSpec((c_tile, 1, 1), lambda n, c: (c, 0, 0)),
            pl.BlockSpec((c_tile, 1, 1), lambda n, c: (c, 0, 0)),
        ],
        out_specs=pl.BlockSpec((c_tile, H, W),
                               lambda n, c: (n * c_steps + c, 0, 0)),
        compiler_params=pltpu.CompilerParams(
            dimension_semantics=("parallel", "parallel"),
            vmem_limit_bytes=vmem_limit,
        ),
    )(x_rows, nx, g3, b3)
    return out_rows.reshape(N, C, H, W)


def grn_reference(x, gamma, beta):
    """Pure-JAX reference matching the PyTorch forward exactly."""
    gx = jnp.sqrt(jnp.sum(x * x, axis=(1, 2), keepdims=True))     # (N,1,1,W)
    nx = gx / (jnp.mean(gx, axis=-1, keepdims=True) + _EPS)       # (N,1,1,W)
    g = gamma.reshape(1, -1, 1, 1)
    b = beta.reshape(1, -1, 1, 1)
    return g * (x * nx) + b + x


if __name__ == "__main__":
    key = jax.random.PRNGKey(0)
    kx, kg, kb = jax.random.split(key, 3)

    N, C, H, W = 2, 4, 16, 16
    x = jax.random.normal(kx, (N, C, H, W), dtype=jnp.float32)
    # Module __init__ zeros gamma/beta; use non-trivial values so the kernel's
    # scale/affine path is exercised (C per-channel params, as in the module).
    gamma = jax.random.normal(kg, (C,), dtype=jnp.float32)
    beta = jax.random.normal(kb, (C,), dtype=jnp.float32)

    ref = grn_reference(x, gamma, beta)

    # Fused single-pass path (default for these shapes).
    out = jax.block_until_ready(grn_pallas(x, gamma, beta))
    assert out.shape == (N, C, H, W)
    assert jnp.allclose(out, ref, atol=1e-4, rtol=1e-5), "fused path mismatch"

    # Also exercise the two-pass (plane-too-big-for-VMEM) fallback on the same
    # small shapes by forcing its threshold to zero.
    out2 = jax.block_until_ready(
        grn_pallas(x, gamma, beta, fused_plane_limit_bytes=0))
    assert jnp.allclose(out2, ref, atol=1e-4, rtol=1e-5), "two-pass mismatch"

    print("KERNEL_OK")
</pallas_src>

<mosaic_0001>
module attributes {stable_mosaic.version = 11 : i64} {
  func.func @_grn_fused_kernel(%arg0: i32, %arg1: memref<1x64x16xf32, #tpu.memory_space<vmem>>, %arg2: memref<1x64x1xf32, #tpu.memory_space<vmem>>, %arg3: memref<1x64x1xf32, #tpu.memory_space<vmem>>, %arg4: memref<1x64x16xf32, #tpu.memory_space<vmem>>) attributes {dimension_semantics = [#tpu.dimension_semantics<parallel>], iteration_bounds = array<i64: 2>, scalar_prefetch = 0 : i64, scratch_operands = 0 : i64, tpu.core_type = #tpu.core_type<tc>, window_params = [{transform_indices = @transform_0, window_bounds = array<i64: 1, 64, 16>}, {pipeline_mode = #tpu.pipeline_mode<synchronous>, transform_indices = @transform_1, window_bounds = array<i64: 1, 64, 1>}, {pipeline_mode = #tpu.pipeline_mode<synchronous>, transform_indices = @transform_2, window_bounds = array<i64: 1, 64, 1>}, {transform_indices = @transform_3, window_bounds = array<i64: 1, 64, 16>}]} {
    %c0 = arith.constant 0 : index
    %c0_0 = arith.constant 0 : index
    %c0_1 = arith.constant 0 : index
    %0 = vector.load %arg1[%c0, %c0_0, %c0_1] : memref<1x64x16xf32, #tpu.memory_space<vmem>>, vector<1x64x16xf32>
    %1 = arith.mulf %0, %0 : vector<1x64x16xf32>
    %cst = arith.constant dense<0.000000e+00> : vector<1x16xf32>
    %2 = vector.multi_reduction <add>, %1, %cst [1] : vector<1x64x16xf32> to vector<1x16xf32>
    %3 = vector.shape_cast %2 : vector<1x16xf32> to vector<1x1x16xf32>
    %4 = math.sqrt %3 : vector<1x1x16xf32>
    %cst_2 = arith.constant dense<0.000000e+00> : vector<1x1xf32>
    %5 = vector.multi_reduction <add>, %4, %cst_2 [2] : vector<1x1x16xf32> to vector<1x1xf32>
    %6 = vector.shape_cast %5 : vector<1x1xf32> to vector<1x1x1xf32>
    %cst_3 = arith.constant 1.600000e+01 : f32
    %7 = vector.broadcast %cst_3 : f32 to vector<1x1x1xf32>
    %8 = arith.divf %6, %7 : vector<1x1x1xf32>
    %cst_4 = arith.constant 9.99999997E-7 : f32
    %9 = vector.broadcast %cst_4 : f32 to vector<1x1x1xf32>
    %10 = arith.addf %8, %9 : vector<1x1x1xf32>
    %11 = vector.broadcast %10 : vector<1x1x1xf32> to vector<1x1x16xf32>
    %12 = arith.divf %4, %11 : vector<1x1x16xf32>
    %c0_5 = arith.constant 0 : index
    %c0_6 = arith.constant 0 : index
    %c0_7 = arith.constant 0 : index
    %13 = vector.load %arg2[%c0_5, %c0_6, %c0_7] : memref<1x64x1xf32, #tpu.memory_space<vmem>>, vector<1x64x1xf32>
    %c0_8 = arith.constant 0 : index
    %c0_9 = arith.constant 0 : index
    %c0_10 = arith.constant 0 : index
    %14 = vector.load %arg3[%c0_8, %c0_9, %c0_10] : memref<1x64x1xf32, #tpu.memory_space<vmem>>, vector<1x64x1xf32>
    %15 = vector.broadcast %12 : vector<1x1x16xf32> to vector<1x64x16xf32>
    %16 = arith.mulf %0, %15 : vector<1x64x16xf32>
    %17 = vector.broadcast %13 : vector<1x64x1xf32> to vector<1x64x16xf32>
    %18 = arith.mulf %17, %16 : vector<1x64x16xf32>
    %19 = vector.broadcast %14 : vector<1x64x1xf32> to vector<1x64x16xf32>
    %20 = arith.addf %18, %19 : vector<1x64x16xf32>
    %21 = arith.addf %20, %0 : vector<1x64x16xf32>
    %c0_11 = arith.constant 0 : index
    %c0_12 = arith.constant 0 : index
    %c0_13 = arith.constant 0 : index
    %22 = vector.load %arg4[%c0_11, %c0_12, %c0_13] : memref<1x64x16xf32, #tpu.memory_space<vmem>>, vector<1x64x16xf32>
    tpu.vector_store %arg4[%c0_11, %c0_12, %c0_13], %21 {strides = array<i32>} : memref<1x64x16xf32, #tpu.memory_space<vmem>>, vector<1x64x16xf32>,
    return
  }
  func.func @transform_0(%arg0: i32) -> (i32, i32, i32) {
    %c0_i32 = arith.constant 0 : i32
    %c0_i32_0 = arith.constant 0 : i32
    %c0_i32_1 = arith.constant 0 : i32
    return %arg0, %c0_i32, %c0_i32_0 : i32, i32, i32
  }
  func.func @transform_1(%arg0: i32) -> (i32, i32, i32) {
    %c0_i32 = arith.constant 0 : i32
    %c0_i32_0 = arith.constant 0 : i32
    %c0_i32_1 = arith.constant 0 : i32
    %c0_i32_2 = arith.constant 0 : i32
    return %c0_i32, %c0_i32_0, %c0_i32_1 : i32, i32, i32
  }
  func.func @transform_2(%arg0: i32) -> (i32, i32, i32) {
    %c0_i32 = arith.constant 0 : i32
    %c0_i32_0 = arith.constant 0 : i32
    %c0_i32_1 = arith.constant 0 : i32
    %c0_i32_2 = arith.constant 0 : i32
    return %c0_i32, %c0_i32_0, %c0_i32_1 : i32, i32, i32
  }
  func.func @transform_3(%arg0: i32) -> (i32, i32, i32) {
    %c0_i32 = arith.constant 0 : i32
    %c0_i32_0 = arith.constant 0 : i32
    %c0_i32_1 = arith.constant 0 : i32
    return %arg0, %c0_i32, %c0_i32_0 : i32, i32, i32
  }
}

</mosaic_0001>

<llo_original>
// kernel: grn_pallas.1
$region0: #{grn_pallas.1}
  #allocation0 [shape = 'u32[]', space=smem, size = 0x4, offset = 0x4, fixed_abs, tag = 'smem constant byte address 0x4 - core index']
  #allocation1 [shape = 'u32[144,128]{1,0:T(1,128)}', space=vmem, size = 0x12000, scoped, tag = 'internal scratch']
  %s0 = inlined_call_operand.vmem [shape: f32[2,64,16], index: 0, kind: input, shape index: {}]
  %s1 = inlined_call_operand.vmem [shape: f32[1,64,1], index: 1, kind: input, shape index: {}]
  %s2 = inlined_call_operand.vmem [shape: f32[1,64,1], index: 2, kind: input, shape index: {}]
  %s3 = inlined_call_operand.hbm [shape: f32[2,64,16], index: 3, kind: output, shape index: {}]
  %s4 = sld [smem:[#allocation0]]
  $region45: #{grn_pallas.1} parent=0
    _
  %s6 = ssub.s32 1, %s4
  %s7 = scalar_select 0, %s6, %s4
  $region1: #{grn_pallas.1} parent=0
    #allocation2 [shape = 'u8[65536]{0}', space=vmem, size = 0x10000, scoped, tag = 'output window, operand 0']
    #allocation3 [shape = 's32[2]{0}', space=sflag, size = 0x8, scoped, tag = 'scoped memory for grn_pallas.1']
    %8 = vsyncpa [#allocation3], 0
    %s9 = scalar_lea.sflag [#allocation3], 1
    %10 = vsyncpa %s9, 0
    loop: start=0, step=1, limit=4
    $region2: #{grn_pallas.1} parent=1 // loop_pre_header
      _
    $region3: #{grn_pallas.1} parent=1 // loop_header
      %s12 = sphi 0, %s16
      %p13 = scmp.ge.s32.totalorder %s12, 4
      %s22 = sphi 0, %s24
      %s25 = sphi 0, %s22
      %s26 = sphi 0, %s25
      %s42 = sphi 0, %s26
      %s46 = sphi 0, %s46
      %s48 = sphi 0, %s46
      %s49 = sphi 0, %s48
      %s63 = sphi 0, %s49
      %s67 = sphi 0, %s67
      %s69 = sphi 0, %s67
      %s70 = sphi 0, %s69
      %s84 = sphi 0, %s70
      %s90 = sphi 0, %s92
      %s93 = sphi 0, %s90
      %s94 = sphi 0, %s93
      %s110 = sphi 0, %s94
    $region4: #{grn_pallas.1} parent=1 // loop_header_branch
      %15 = sbr.rel (%p13) target = $region8
    $region5: #{grn_pallas.1} parent=1 // loop_body
      %s17 = ssub.s32 %s12, 1
      %s18 = ssub.s32 %s12, 2
      %s19 = sadd.s32 %s12, 1
      %s20 = ssub.s32 %s12, %s19
      %p21 = scmp.eq.s32.totalorder %s20, 0
      %s23 = sadd.s32 %s22, 1
      %s24 = scalar_select %p21, %s22, %s23
      %p27 = pneg %p21
      %p28 = scmp.eq.s32.totalorder %s12, 1
      %p29 = por %p27, %p28
      %p30 = scmp.ne.s32.totalorder %s22, %s25
      %p31 = scmp.eq.s32.totalorder %s12, 0
      %p32 = por %p30, %p31
      %p33 = scmp.ne.s32.totalorder %s22, %s25
      %p34 = scmp.eq.s32.totalorder %s17, 1
      %p35 = por %p33, %p34
      %p36 = scmp.ne.s32.totalorder %s25, %s26
      %p37 = scmp.eq.s32.totalorder %s17, 0
      %p38 = por %p36, %p37
      %p39 = scmp.ne.s32.totalorder %s25, %s26
      %p40 = scmp.eq.s32.totalorder %s18, 1
      %p41 = por %p39, %p40
      %p43 = scmp.ne.s32.totalorder %s26, %s42
      %p44 = scmp.eq.s32.totalorder %s18, 0
      %p45 = por %p43, %p44
      %s47 = sadd.s32 %s46, 1
      %p50 = scmp.eq.s32.totalorder %s12, 1
      %p51 = scmp.ne.s32.totalorder %s46, %s48
      %p52 = scmp.eq.s32.totalorder %s12, 0
      %p53 = por %p51, %p52
      %p54 = scmp.ne.s32.totalorder %s46, %s48
      %p55 = scmp.eq.s32.totalorder %s17, 1
      %p56 = por %p54, %p55
      %p57 = scmp.ne.s32.totalorder %s48, %s49
      %p58 = scmp.eq.s32.totalorder %s17, 0
      %p59 = por %p57, %p58
      %p60 = scmp.ne.s32.totalorder %s48, %s49
      %p61 = scmp.eq.s32.totalorder %s18, 1
      %p62 = por %p60, %p61
      %p64 = scmp.ne.s32.totalorder %s49, %s63
      %p65 = scmp.eq.s32.totalorder %s18, 0
      %p66 = por %p64, %p65
      %s68 = sadd.s32 %s67, 1
      %p71 = scmp.eq.s32.totalorder %s12, 1
      %p72 = scmp.ne.s32.totalorder %s67, %s69
      %p73 = scmp.eq.s32.totalorder %s12, 0
      %p74 = por %p72, %p73
      %p75 = scmp.ne.s32.totalorder %s67, %s69
      %p76 = scmp.eq.s32.totalorder %s17, 1
      %p77 = por %p75, %p76
      %p78 = scmp.ne.s32.totalorder %s69, %s70
      %p79 = scmp.eq.s32.totalorder %s17, 0
      %p80 = por %p78, %p79
      %p81 = scmp.ne.s32.totalorder %s69, %s70
      %p82 = scmp.eq.s32.totalorder %s18, 1
      %p83 = por %p81, %p82
      %p85 = scmp.ne.s32.totalorder %s70, %s84
      %p86 = scmp.eq.s32.totalorder %s18, 0
      %p87 = por %p85, %p86
      %s88 = ssub.s32 %s12, %s19
      %p89 = scmp.eq.s32.totalorder %s88, 0
      %s91 = sadd.s32 %s90, 1
      %s92 = scalar_select %p89, %s90, %s91
      %p95 = pneg %p89
      %p96 = scmp.eq.s32.totalorder %s12, 1
      %p97 = por %p95, %p96
      %p98 = scmp.ne.s32.totalorder %s90, %s93
      %p99 = scmp.eq.s32.totalorder %s12, 0
      %p100 = por %p98, %p99
      %p101 = scmp.ne.s32.totalorder %s90, %s93
      %p102 = scmp.eq.s32.totalorder %s17, 1
      %p103 = por %p101, %p102
      %p104 = scmp.ne.s32.totalorder %s93, %s94
      %p105 = scmp.eq.s32.totalorder %s17, 0
      %p106 = por %p104, %p105
      %p107 = scmp.ne.s32.totalorder %s93, %s94
      %p108 = scmp.eq.s32.totalorder %s18, 1
      %p109 = por %p107, %p108
      %p111 = scmp.ne.s32.totalorder %s94, %s110
      %p112 = scmp.eq.s32.totalorder %s18, 0
      %p113 = por %p111, %p112
      %p114 = scmp.le.s32.totalorder 1, %s12
      %p115 = scmp.lt.s32.totalorder %s12, 3
      %p116 = pnand %p114, %p115
      %p117 = pneg %p116
      // Predicated region
      $region9: #{grn_pallas.1} parent=5 // pred_check
        _
      $region10: #{grn_pallas.1} parent=5 // pred_check_branch
        %119 = sbr.rel (%p116) target = $region12
      $region11: #{grn_pallas.1} parent=5 // pred_region
        %s120 = ssub.s32 %s12, 1
        // Predicated region
        $region13: #{grn_pallas.1} parent=11 // pred_check
          %p121 = pneg %p59
        $region14: #{grn_pallas.1} parent=11 // pred_check_branch
          %123 = sbr.rel (%p121) target = $region16
        $region15: #{grn_pallas.1} parent=11 // pred_region
          _
        $region16: #{grn_pallas.1} parent=11 // pred_fallthru
          _
        // Predicated region
        $region17: #{grn_pallas.1} parent=11 // pred_check
          %p124 = pneg %p80
        $region18: #{grn_pallas.1} parent=11 // pred_check_branch
          %126 = sbr.rel (%p124) target = $region20
        $region19: #{grn_pallas.1} parent=11 // pred_region
          _
        $region20: #{grn_pallas.1} parent=11 // pred_fallthru
          _
      $region12: #{grn_pallas.1} parent=5 // pred_fallthru
        _
      %p127 = scmp.lt.s32.totalorder %s12, 2
      // Predicated region
      $region21: #{grn_pallas.1} parent=5 // pred_check
        %p128 = pneg %p127
      $region22: #{grn_pallas.1} parent=5 // pred_check_branch
        %130 = sbr.rel (%p128) target = $region24
      $region23: #{grn_pallas.1} parent=5 // pred_region
        // Predicated region
        $region25: #{grn_pallas.1} parent=23 // pred_check
          %p131 = pneg %p32
        $region26: #{grn_pallas.1} parent=23 // pred_check_branch
          %133 = sbr.rel (%p131) target = $region28
        $region27: #{grn_pallas.1} parent=23 // pred_region
          %p134 = scmp.lt.s32.totalorder %s12, 1
          %s135 = scalar_select %p134, %s12, 1
          %s136 = smul.addr %s135, 8
          %s137 = smul.addr %s136, 8
          %s138 = scalar_lea.vmem %s0, %s137
        $region28: #{grn_pallas.1} parent=23 // pred_fallthru
          _
      $region24: #{grn_pallas.1} parent=5 // pred_fallthru
        _
      %p139 = scmp.le.s32.totalorder 1, %s12
      %p140 = scmp.lt.s32.totalorder %s12, 3
      %p141 = pnand %p139, %p140
      %p142 = pneg %p141
      // Predicated region
      $region29: #{grn_pallas.1} parent=5 // pred_check
        _
      $region30: #{grn_pallas.1} parent=5 // pred_check_branch
        %144 = sbr.rel (%p141) target = $region32
      $region31: #{grn_pallas.1} parent=5 // pred_region
        %s145 = ssub.s32 %s12, 1
        %p146 = scmp.lt.s32.totalorder %s17, 1
        %s147 = scalar_select %p146, %s17, 1
        %s148 = smul.addr %s147, 8
        %s149 = smul.addr %s148, 8
        %s150 = scalar_lea.vmem %s0, %s149
        %p151 = pneg %p38
        %p152 = pneg %p35
        %p153 = pneg %p59
        %p154 = pneg %p56
        %p155 = pneg %p80
        %p156 = pneg %p77
        %p157 = pneg %p106
        %p158 = pneg %p103
        %s159 = sand.u32 %s93, 1
        %s160 = scalar_lea.sflag [#allocation3], %s159
        %s161 = sand.u32 %s93, 1
        %s162 = smul.addr %s161, 64
        %s163 = scalar_lea.vmem [#allocation2], %s162
        %p164 = scmp.lt.s32.totalorder %s17, 1
        %s165 = scalar_select %p164, %s17, 1
        %s166 = smul.addr %s165, 8
        %s167 = smul.addr %s166, 8
        %s168 = scalar_lea.vmem %s0, %s167
        %v169 = vld [vmem:[%s168] sm:$0xff]
        %v170 = vld [vmem:[%s168 + $0x8] sm:$0xff]
        %v171 = vld [vmem:[%s168 + $0x10] sm:$0xff]
        %v172 = vld [vmem:[%s168 + $0x18] sm:$0xff]
        %v173 = vld [vmem:[%s168 + $0x20] sm:$0xff]
        %v174 = vld [vmem:[%s168 + $0x28] sm:$0xff]
        %v175 = vld [vmem:[%s168 + $0x30] sm:$0xff]
        %v176 = vld [vmem:[%s168 + $0x38] sm:$0xff]
        %v177 = vmul.f32 %v169, %v169
        %v178 = vmul.f32 %v170, %v170
        %v179 = vmul.f32 %v171, %v171
        %v180 = vmul.f32 %v172, %v172
        %v181 = vmul.f32 %v173, %v173
        %v182 = vmul.f32 %v174, %v174
        %v183 = vmul.f32 %v175, %v175
        %v184 = vmul.f32 %v176, %v176
        %vm185 = vcmask 130048
        %v186 = vsel %vm185, %v177, 0.0
        %v187 = vsel %vm185, %v178, 0.0
        %v188 = vadd.f32 %v186, %v187
        %v189 = vsel %vm185, %v179, 0.0
        %v190 = vadd.f32 %v188, %v189
        %v191 = vsel %vm185, %v180, 0.0
        %v192 = vadd.f32 %v190, %v191
        %v193 = vsel %vm185, %v181, 0.0
        %v194 = vadd.f32 %v192, %v193
        %v195 = vsel %vm185, %v182, 0.0
        %v196 = vadd.f32 %v194, %v195
        %v197 = vsel %vm185, %v183, 0.0
        %v198 = vadd.f32 %v196, %v197
        %v199 = vsel %vm185, %v184, 0.0
        %v200 = vadd.f32 %v198, %v199
        %v201 = vrot.slane %v200, 4
        %v202 = vadd.f32 %v200, %v201
        %v203 = vrot.slane %v202, 2
        %v204 = vadd.f32 %v202, %v203
        %v205 = vrot.slane %v204, 1
        %v206 = vadd.f32 %v204, %v205
        %v207 = vrsqrt.pop %v206
        %v208 = vmul.f32 %v206, %v207
        %vm209 = vcmp.eq.f32.partialorder %v206, inf
        %v210 = vsel %vm209, %v206, %v208
        %vm211 = vcmp.eq.f32.partialorder %v206, 0.0
        %v212 = vand.u32 %v206, 2147483648
        %v213 = vsel %vm211, %v212, %v210
        %v214 = vsel %vm185, %v213, 0.0
        %215 = vadd.xlane.f32.xlu0 %v214
        %v216 = vpop.xlane.xlu0 %215
        %v217 = vrcp.pop 16.0
        %v218 = vmul.f32 %v216, %v217
        %v219 = vadd.f32 %v218, 1e-06
        %v220 = vrcp.pop %v219
        %v221 = vmul.f32 %v213, %v220
        %v222 = vld [vmem:[%s1] sm:$0xff]
        %v223 = vld [vmem:[%s1 + $0x8] sm:$0xff]
        %v224 = vld [vmem:[%s1 + $0x10] sm:$0xff]
        %v225 = vld [vmem:[%s1 + $0x18] sm:$0xff]
        %v226 = vld [vmem:[%s1 + $0x20] sm:$0xff]
        %v227 = vld [vmem:[%s1 + $0x28] sm:$0xff]
        %v228 = vld [vmem:[%s1 + $0x30] sm:$0xff]
        %v229 = vld [vmem:[%s1 + $0x38] sm:$0xff]
        %v230 = vld [vmem:[%s2] sm:$0xff]
        %v231 = vld [vmem:[%s2 + $0x8] sm:$0xff]
        %v232 = vld [vmem:[%s2 + $0x10] sm:$0xff]
        %v233 = vld [vmem:[%s2 + $0x18] sm:$0xff]
        %v234 = vld [vmem:[%s2 + $0x20] sm:$0xff]
        %v235 = vld [vmem:[%s2 + $0x28] sm:$0xff]
        %v236 = vld [vmem:[%s2 + $0x30] sm:$0xff]
        %v237 = vld [vmem:[%s2 + $0x38] sm:$0xff]
        %v238 = vmul.f32 %v169, %v221
        %v239 = vmul.f32 %v170, %v221
        %v240 = vmul.f32 %v171, %v221
        %v241 = vmul.f32 %v172, %v221
        %v242 = vmul.f32 %v173, %v221
        %v243 = vmul.f32 %v174, %v221
        %v244 = vmul.f32 %v175, %v221
        %v245 = vmul.f32 %v176, %v221
        %247 = vset.pattern.permute.xlu0 0
        %248 = vperm.xlu0 %247, %v222
        %v249 = vpop.permute.xlu0 %248
        %252 = vset.pattern.permute.xlu0 0
        %253 = vperm.xlu0 %252, %v223
        %v254 = vpop.permute.xlu0 %253
        %257 = vset.pattern.permute.xlu0 0
        %258 = vperm.xlu0 %257, %v224
        %v259 = vpop.permute.xlu0 %258
        %262 = vset.pattern.permute.xlu0 0
        %263 = vperm.xlu0 %262, %v225
        %v264 = vpop.permute.xlu0 %263
        %267 = vset.pattern.permute.xlu0 0
        %268 = vperm.xlu0 %267, %v226
        %v269 = vpop.permute.xlu0 %268
        %272 = vset.pattern.permute.xlu0 0
        %273 = vperm.xlu0 %272, %v227
        %v274 = vpop.permute.xlu0 %273
        %277 = vset.pattern.permute.xlu0 0
        %278 = vperm.xlu0 %277, %v228
        %v279 = vpop.permute.xlu0 %278
        %282 = vset.pattern.permute.xlu0 0
        %283 = vperm.xlu0 %282, %v229
        %v284 = vpop.permute.xlu0 %283
        %v286 = vmul.f32 %v249, %v238
        %v287 = vmul.f32 %v254, %v239
        %v288 = vmul.f32 %v259, %v240
        %v289 = vmul.f32 %v264, %v241
        %v290 = vmul.f32 %v269, %v242
        %v291 = vmul.f32 %v274, %v243
        %v292 = vmul.f32 %v279, %v244
        %v293 = vmul.f32 %v284, %v245
        %295 = vset.pattern.permute.xlu0 0
        %296 = vperm.xlu0 %295, %v230
        %v297 = vpop.permute.xlu0 %296
        %300 = vset.pattern.permute.xlu0 0
        %301 = vperm.xlu0 %300, %v231
        %v302 = vpop.permute.xlu0 %301
        %305 = vset.pattern.permute.xlu0 0
        %306 = vperm.xlu0 %305, %v232
        %v307 = vpop.permute.xlu0 %306
        %310 = vset.pattern.permute.xlu0 0
        %311 = vperm.xlu0 %310, %v233
        %v312 = vpop.permute.xlu0 %311
        %315 = vset.pattern.permute.xlu0 0
        %316 = vperm.xlu0 %315, %v234
        %v317 = vpop.permute.xlu0 %316
        %320 = vset.pattern.permute.xlu0 0
        %321 = vperm.xlu0 %320, %v235
        %v322 = vpop.permute.xlu0 %321
        %325 = vset.pattern.permute.xlu0 0
        %326 = vperm.xlu0 %325, %v236
        %v327 = vpop.permute.xlu0 %326
        %330 = vset.pattern.permute.xlu0 0
        %331 = vperm.xlu0 %330, %v237
        %v332 = vpop.permute.xlu0 %331
        %v334 = vadd.f32 %v286, %v297
        %v335 = vadd.f32 %v287, %v302
        %v336 = vadd.f32 %v288, %v307
        %v337 = vadd.f32 %v289, %v312
        %v338 = vadd.f32 %v290, %v317
        %v339 = vadd.f32 %v291, %v322
        %v340 = vadd.f32 %v292, %v327
        %v341 = vadd.f32 %v293, %v332
        %v342 = vadd.f32 %v334, %v169
        %v343 = vadd.f32 %v335, %v170
        %v344 = vadd.f32 %v336, %v171
        %v345 = vadd.f32 %v337, %v172
        %v346 = vadd.f32 %v338, %v173
        %v347 = vadd.f32 %v339, %v174
        %v348 = vadd.f32 %v340, %v175
        %v349 = vadd.f32 %v341, %v176
        %350 = vst.msk [vmem:[%s163] sm:$0xff] %vm185, %v342
        %351 = vst.msk [vmem:[%s163 + $0x8] sm:$0xff] %vm185, %v343
        %352 = vst.msk [vmem:[%s163 + $0x10] sm:$0xff] %vm185, %v344
        %353 = vst.msk [vmem:[%s163 + $0x18] sm:$0xff] %vm185, %v345
        %354 = vst.msk [vmem:[%s163 + $0x20] sm:$0xff] %vm185, %v346
        %355 = vst.msk [vmem:[%s163 + $0x28] sm:$0xff] %vm185, %v347
        %356 = vst.msk [vmem:[%s163 + $0x30] sm:$0xff] %vm185, %v348
        %357 = vst.msk [vmem:[%s163 + $0x38] sm:$0xff] %vm185, %v349
        %s358 = sand.u32 %s93, 1
        %s359 = scalar_lea.sflag [#allocation3], %s358
        %s360 = sand.u32 %s93, 1
        %s361 = smul.addr %s360, 64
        %s362 = scalar_lea.vmem [#allocation2], %s361
        // Predicated region
        $region33: #{grn_pallas.1} parent=31 // pred_check
          %p363 = pneg %p103
        $region34: #{grn_pallas.1} parent=31 // pred_check_branch
          %365 = sbr.rel (%p363) target = $region36
        $region35: #{grn_pallas.1} parent=31 // pred_region
          %s367 = ssub.s32 1024, 1024
          %368 = vsyncadd %s359, %s367
          %s369 = smul.addr %s17, 8
          %s370 = smul.addr %s369, 128
          %s371 = scalar_lea.hbm %s3, %s370
          %s372 = sshll.u32 %s362, 4
          %s373 = int_to_ptr.vmem [resolvable:$true] %s372
          %378 = dma.vmem_to_hbm [thread:$0]  %s373, 1024, %s371, %s359, 128, 128, 8
        $region36: #{grn_pallas.1} parent=31 // pred_fallthru
          _
      $region32: #{grn_pallas.1} parent=5 // pred_fallthru
        _
      %p379 = scmp.le.s32.totalorder 2, %s12
      // Predicated region
      $region37: #{grn_pallas.1} parent=5 // pred_check
        %p380 = pneg %p379
      $region38: #{grn_pallas.1} parent=5 // pred_check_branch
        %382 = sbr.rel (%p380) target = $region40
      $region39: #{grn_pallas.1} parent=5 // pred_region
        %s383 = ssub.s32 %s12, 2
        // Predicated region
        $region41: #{grn_pallas.1} parent=39 // pred_check
          %p384 = pneg %p109
        $region42: #{grn_pallas.1} parent=39 // pred_check_branch
          %386 = sbr.rel (%p384) target = $region44
        $region43: #{grn_pallas.1} parent=39 // pred_region
          %s387 = sand.u32 %s94, 1
          %s388 = scalar_lea.sflag [#allocation3], %s387
          %s389 = sand.u32 %s94, 1
          %s390 = smul.addr %s389, 64
          %s391 = scalar_lea.vmem [#allocation2], %s390
          %392 = dma.done %s388, 1024
        $region44: #{grn_pallas.1} parent=39 // pred_fallthru
          _
      $region40: #{grn_pallas.1} parent=5 // pred_fallthru
        _
    $region6: #{grn_pallas.1} parent=1 // loop_footer
      %s16 = sadd.s32 1, %s12
    $region7: #{grn_pallas.1} parent=1 // loop_footer_branch
      %11 = sbr.rel target = $region3
    $region8: #{grn_pallas.1} parent=1 // loop_exit
      _
    %393 = vsyncpa [#allocation3], 1
    %s394 = scalar_lea.sflag [#allocation3], 1
    %395 = vsyncpa %s394, 1

</llo_original>
